<compile_context>
chip_gen: v7x
topology: tpu7x:2x2x1
jax: 0.10.0
libtpu: 0.0.40
codegen_flags: <defaults>
</compile_context>

<pallas_src>
import functools

import jax
import jax.numpy as jnp
from jax.experimental import pallas as pl
from jax.experimental.pallas import tpu as pltpu

LANES = 128
MAX_ROW_TILE = 4096                 # (4096, 128) f32 block = 2 MiB per buffer
VMEM_LIMIT_BYTES = 32 * 1024 * 1024


def _num_parallel_chunks():
    """Leading 'parallel' chunks for the reduction path.

    2 only on dual-TensorCore chips (v7x); on single-TC chips (v5e/v6e) a
    leading parallel axis is just a serial outer loop, so keep it at 1.
    """
    try:
        kind = jax.devices()[0].device_kind.lower()
    except Exception:
        return 1
    return 2 if "7" in kind else 1


def _charbonnier_sum_kernel(pred_ref, tgt_ref, out_ref, acc_ref, *,
                            eps, n_rows, row_tile, blocks_per_chunk,
                            mask_start, fold_acc):
    p = pl.program_id(0)            # parallel chunk (one per TensorCore on v7x)
    j = pl.program_id(1)            # reduction steps within the chunk

    @pl.when(j == 0)
    def _():
        acc_ref[...] = jnp.zeros_like(acc_ref)

    d = pred_ref[...].astype(jnp.float32) - tgt_ref[...].astype(jnp.float32)
    val = jnp.sqrt(d * d + jnp.float32(eps))

    block_idx = p * blocks_per_chunk + j   # logical (unclamped) block index

    def accumulate(v):
        if fold_acc:
            # (row_tile, 128) -> (row_tile//8, 8, 128): the (8, 128) inner
            # shape is exactly one f32 tile, so this reshape stays a view and
            # the axis-0 sum is a pure VPU vreg-add tree into a single-vreg
            # accumulator.
            acc_ref[...] += v.reshape(-1, 8, LANES).sum(axis=0)
        else:
            acc_ref[...] += v

    if mask_start is None:
        # Every block is fully valid: no masking work at all.
        accumulate(val)
    else:
        @pl.when(block_idx < mask_start)
        def _():
            accumulate(val)

        @pl.when(block_idx >= mask_start)
        def _():
            # Row-only mask (no flattened int32 index): rows past n_rows are
            # either the ragged tail of the last block or a fully
            # out-of-range (clamped re-read) block.
            row_ids = jax.lax.broadcasted_iota(jnp.int32, val.shape, 0)
            valid = (block_idx * row_tile + row_ids) < n_rows
            accumulate(jnp.where(valid, val, 0.0))

    @pl.when(j == pl.num_programs(1) - 1)
    def _():
        out_ref[...] = jnp.sum(acc_ref[...]).reshape(1, 1, 1)


def _charbonnier_none_kernel(pred_ref, tgt_ref, out_ref, *, eps):
    d = pred_ref[...].astype(jnp.float32) - tgt_ref[...].astype(jnp.float32)
    out_ref[...] = jnp.sqrt(d * d + jnp.float32(eps)).astype(out_ref.dtype)


def _charbonnier_sum(p2d, t2d, eps):
    """On-TPU reduction of sqrt((p-t)^2 + eps) over a (rows, 128) slab."""
    rows = p2d.shape[0]
    row_tile = min(MAX_ROW_TILE, rows)
    total_blocks = pl.cdiv(rows, row_tile)

    num_chunks = min(_num_parallel_chunks(), total_blocks)
    bpc = pl.cdiv(total_blocks, num_chunks)

    last_block_partial = (total_blocks * row_tile) != rows
    has_oob_blocks = (num_chunks * bpc) != total_blocks
    if last_block_partial:
        mask_start = total_blocks - 1
    elif has_oob_blocks:
        mask_start = total_blocks
    else:
        mask_start = None            # no masking ever needed

    fold_acc = (row_tile % 8) == 0
    acc_shape = (8, LANES) if fold_acc else (row_tile, LANES)

    def in_map(p, j):
        # Clamp so a (rare) out-of-range step re-reads the last valid block;
        # the in-kernel row mask zeroes its contribution.
        return (jnp.minimum(p * bpc + j, total_blocks - 1), 0)

    partials = pl.pallas_call(
        functools.partial(
            _charbonnier_sum_kernel, eps=eps, n_rows=rows, row_tile=row_tile,
            blocks_per_chunk=bpc, mask_start=mask_start, fold_acc=fold_acc),
        out_shape=jax.ShapeDtypeStruct((num_chunks, 1, 1), jnp.float32),
        grid_spec=pltpu.PrefetchScalarGridSpec(
            num_scalar_prefetch=0,
            grid=(num_chunks, bpc),
            in_specs=[
                pl.BlockSpec((row_tile, LANES), in_map),
                pl.BlockSpec((row_tile, LANES), in_map),
            ],
            out_specs=pl.BlockSpec((1, 1, 1), lambda p, j: (p, 0, 0)),
            scratch_shapes=[pltpu.VMEM(acc_shape, jnp.float32)],
        ),
        # TODO(synk): on v7x verify the leading "parallel" axis shards across
        # both TensorCores (xprof); switch to pltpu.CORE_PARALLEL if it doesn't.
        compiler_params=pltpu.CompilerParams(
            dimension_semantics=("parallel", "arbitrary"),
            vmem_limit_bytes=VMEM_LIMIT_BYTES),
    )(p2d, t2d)
    return jnp.sum(partials)


def _charbonnier_none(p2d, t2d, eps, out_dtype):
    rows = p2d.shape[0]
    row_tile = min(MAX_ROW_TILE, rows)
    total_blocks = pl.cdiv(rows, row_tile)
    return pl.pallas_call(
        functools.partial(_charbonnier_none_kernel, eps=eps),
        out_shape=jax.ShapeDtypeStruct((rows, LANES), out_dtype),
        grid_spec=pltpu.PrefetchScalarGridSpec(
            num_scalar_prefetch=0,
            grid=(total_blocks,),
            in_specs=[
                pl.BlockSpec((row_tile, LANES), lambda i: (i, 0)),
                pl.BlockSpec((row_tile, LANES), lambda i: (i, 0)),
            ],
            out_specs=pl.BlockSpec((row_tile, LANES), lambda i: (i, 0)),
        ),
        compiler_params=pltpu.CompilerParams(
            dimension_semantics=("parallel",),
            vmem_limit_bytes=VMEM_LIMIT_BYTES),
    )(p2d, t2d)


def charbonnier_loss_pallas(pred, target, loss_weight=1.0, reduction="mean",
                            eps=1e-12):
    """Matches basicsr CharbonnierLoss.forward with weight=None."""
    # TODO(synk): element-wise `weight` argument not implemented (default None).
    if reduction not in ("none", "mean", "sum"):
        raise ValueError(f"Unsupported reduction mode: {reduction}")

    p_flat = pred.reshape(-1)
    t_flat = target.reshape(-1)
    n = p_flat.shape[0]
    n_main = (n // LANES) * LANES    # lane-aligned prefix -> kernel
    rem = n - n_main                 # <128-element tail -> plain JAX
    rows = n_main // LANES

    # TODO(synk): for lane-misaligned n the prefix slice may materialize one
    # copy of each input; avoiding that needs manual DMA over a 1-D layout.
    def tail_f32():
        d = (p_flat[n_main:].astype(jnp.float32)
             - t_flat[n_main:].astype(jnp.float32))
        return jnp.sqrt(d * d + jnp.float32(eps))

    if reduction == "none":
        pieces = []
        if rows > 0:
            p2d = p_flat[:n_main].reshape(rows, LANES)
            t2d = t_flat[:n_main].reshape(rows, LANES)
            pieces.append(
                _charbonnier_none(p2d, t2d, eps, pred.dtype).reshape(-1))
        if rem > 0:
            pieces.append(tail_f32().astype(pred.dtype))
        flat = pieces[0] if len(pieces) == 1 else jnp.concatenate(pieces)
        return loss_weight * flat.reshape(pred.shape)

    total = jnp.float32(0.0)
    if rows > 0:
        p2d = p_flat[:n_main].reshape(rows, LANES)
        t2d = t_flat[:n_main].reshape(rows, LANES)
        total = total + _charbonnier_sum(p2d, t2d, eps)
    if rem > 0:
        total = total + jnp.sum(tail_f32())

    if reduction == "sum":
        return loss_weight * total
    return loss_weight * total / jnp.float32(n)


def _reference(pred, target, loss_weight=1.0, reduction="mean", eps=1e-12):
    loss = jnp.sqrt((pred.astype(jnp.float32)
                     - target.astype(jnp.float32)) ** 2 + jnp.float32(eps))
    if reduction == "mean":
        loss = jnp.mean(loss)
    elif reduction == "sum":
        loss = jnp.sum(loss)
    else:
        loss = loss.astype(pred.dtype)
    return loss_weight * loss


if __name__ == "__main__":
    key = jax.random.PRNGKey(0)
    k1, k2, k3, k4 = jax.random.split(key, 4)

    # Small NCHW inputs, as in the PyTorch module.
    shape = (2, 4, 16, 16)
    pred = jax.random.normal(k1, shape, dtype=jnp.float32)
    target = jax.random.normal(k2, shape, dtype=jnp.float32)
    eps = 1e-12

    out = jax.block_until_ready(
        charbonnier_loss_pallas(pred, target, loss_weight=1.0,
                                reduction="mean", eps=eps))
    ref = _reference(pred, target, 1.0, "mean", eps)
    assert jnp.allclose(out, ref, rtol=1e-5, atol=1e-6), (out, ref)

    out_sum = jax.block_until_ready(
        charbonnier_loss_pallas(pred, target, reduction="sum", eps=eps))
    ref_sum = _reference(pred, target, reduction="sum", eps=eps)
    assert jnp.allclose(out_sum, ref_sum, rtol=1e-5, atol=1e-4), (out_sum, ref_sum)

    out_none = jax.block_until_ready(
        charbonnier_loss_pallas(pred, target, reduction="none", eps=eps))
    ref_none = _reference(pred, target, reduction="none", eps=eps)
    assert jnp.allclose(out_none, ref_none, rtol=1e-5, atol=1e-6)

    # Multi-block path (ragged last block -> masked branch, folded accumulator).
    big_shape = (2, 4, 300, 300)     # 720000 elems -> 5625 rows, 2 blocks of 4096
    pred_b = jax.random.normal(k3, big_shape, dtype=jnp.float32)
    target_b = jax.random.normal(k4, big_shape, dtype=jnp.float32)
    out_b = jax.block_until_ready(
        charbonnier_loss_pallas(pred_b, target_b, reduction="mean", eps=eps))
    ref_b = _reference(pred_b, target_b, reduction="mean", eps=eps)
    assert jnp.allclose(out_b, ref_b, rtol=1e-5, atol=1e-6), (out_b, ref_b)

    # Lane-misaligned numel (plain-JAX tail path, non-folded accumulator).
    odd_shape = (3, 5, 7, 11)        # 1155 elems -> 9 aligned rows + 3 tail elems
    pred_o = jax.random.normal(k1, odd_shape, dtype=jnp.float32)
    target_o = jax.random.normal(k2, odd_shape, dtype=jnp.float32)
    out_o = jax.block_until_ready(
        charbonnier_loss_pallas(pred_o, target_o, reduction="sum", eps=eps))
    ref_o = _reference(pred_o, target_o, reduction="sum", eps=eps)
    assert jnp.allclose(out_o, ref_o, rtol=1e-5, atol=1e-4), (out_o, ref_o)

    print("KERNEL_OK")
</pallas_src>

<mosaic_0001>
module attributes {stable_mosaic.version = 11 : i64} {
  func.func @_charbonnier_sum_kernel(%arg0: i32, %arg1: i32, %arg2: memref<16x128xf32, #tpu.memory_space<vmem>>, %arg3: memref<16x128xf32, #tpu.memory_space<vmem>>, %arg4: memref<1x1x1xf32, #tpu.memory_space<vmem>>, %arg5: memref<8x128xf32, #tpu.memory_space<vmem>>) attributes {dimension_semantics = [#tpu.dimension_semantics<parallel>, #tpu.dimension_semantics<arbitrary>], iteration_bounds = array<i64: 1, 1>, scalar_prefetch = 0 : i64, scratch_operands = 1 : i64, tpu.core_type = #tpu.core_type<tc>, window_params = [{transform_indices = @transform_0, window_bounds = array<i64: 16, 128>}, {transform_indices = @transform_1, window_bounds = array<i64: 16, 128>}, {transform_indices = @transform_2, window_bounds = array<i64: 1, 1, 1>}]} {
    %c0_i32 = arith.constant 0 : i32
    %0 = arith.cmpi eq, %arg1, %c0_i32 : i32
    %1 = arith.extui %0 : i1 to i32
    %c0_i32_0 = arith.constant 0 : i32
    %2 = arith.cmpi ne, %1, %c0_i32_0 : i32
    scf.if %2 {
      %cst_11 = arith.constant 0.000000e+00 : f32
      %18 = vector.broadcast %cst_11 : f32 to vector<8x128xf32>
      %c0_12 = arith.constant 0 : index
      %c0_13 = arith.constant 0 : index
      %19 = vector.load %arg5[%c0_12, %c0_13] : memref<8x128xf32, #tpu.memory_space<vmem>>, vector<8x128xf32>
      tpu.vector_store %arg5[%c0_12, %c0_13], %18 {strides = array<i32>} : memref<8x128xf32, #tpu.memory_space<vmem>>, vector<8x128xf32>,
    } else {
    }
    %c0 = arith.constant 0 : index
    %c0_1 = arith.constant 0 : index
    %3 = vector.load %arg2[%c0, %c0_1] : memref<16x128xf32, #tpu.memory_space<vmem>>, vector<16x128xf32>
    %c0_2 = arith.constant 0 : index
    %c0_3 = arith.constant 0 : index
    %4 = vector.load %arg3[%c0_2, %c0_3] : memref<16x128xf32, #tpu.memory_space<vmem>>, vector<16x128xf32>
    %5 = arith.subf %3, %4 : vector<16x128xf32>
    %6 = arith.mulf %5, %5 : vector<16x128xf32>
    %cst = arith.constant 9.99999996E-13 : f32
    %7 = vector.broadcast %cst : f32 to vector<16x128xf32>
    %8 = arith.addf %6, %7 : vector<16x128xf32>
    %9 = math.sqrt %8 : vector<16x128xf32>
    %c0_4 = arith.constant 0 : index
    %c0_5 = arith.constant 0 : index
    %10 = vector.load %arg5[%c0_4, %c0_5] : memref<8x128xf32, #tpu.memory_space<vmem>>, vector<8x128xf32>
    %11 = vector.shape_cast %9 : vector<16x128xf32> to vector<2x8x128xf32>
    %cst_6 = arith.constant dense<0.000000e+00> : vector<8x128xf32>
    %12 = vector.multi_reduction <add>, %11, %cst_6 [0] : vector<2x8x128xf32> to vector<8x128xf32>
    %13 = arith.addf %10, %12 : vector<8x128xf32>
    %c0_7 = arith.constant 0 : index
    %c0_8 = arith.constant 0 : index
    %14 = vector.load %arg5[%c0_7, %c0_8] : memref<8x128xf32, #tpu.memory_space<vmem>>, vector<8x128xf32>
    tpu.vector_store %arg5[%c0_7, %c0_8], %13 {strides = array<i32>} : memref<8x128xf32, #tpu.memory_space<vmem>>, vector<8x128xf32>,
    %c0_i32_9 = arith.constant 0 : i32
    %15 = arith.cmpi eq, %arg1, %c0_i32_9 : i32
    %16 = arith.extui %15 : i1 to i32
    %c0_i32_10 = arith.constant 0 : i32
    %17 = arith.cmpi ne, %16, %c0_i32_10 : i32
    scf.if %17 {
      %c0_11 = arith.constant 0 : index
      %c0_12 = arith.constant 0 : index
      %18 = vector.load %arg5[%c0_11, %c0_12] : memref<8x128xf32, #tpu.memory_space<vmem>>, vector<8x128xf32>
      %19 = vector.shape_cast %18 : vector<8x128xf32> to vector<1x8x128xf32>
      %cst_13 = arith.constant dense<0.000000e+00> : vector<1xf32>
      %20 = vector.multi_reduction <add>, %19, %cst_13 [1, 2] : vector<1x8x128xf32> to vector<1xf32>
      %21 = vector.shape_cast %20 : vector<1xf32> to vector<1x1x1xf32>
      %22 = vector.extract %21[0, 0, 0] : f32 from vector<1x1x1xf32>
      %23 = vector.broadcast %22 : f32 to vector<1x1x1xf32>
      %c0_14 = arith.constant 0 : index
      %c0_15 = arith.constant 0 : index
      %c0_16 = arith.constant 0 : index
      %24 = vector.load %arg4[%c0_14, %c0_15, %c0_16] : memref<1x1x1xf32, #tpu.memory_space<vmem>>, vector<1x1x1xf32>
      tpu.vector_store %arg4[%c0_14, %c0_15, %c0_16], %23 {strides = array<i32>} : memref<1x1x1xf32, #tpu.memory_space<vmem>>, vector<1x1x1xf32>,
    } else {
    }
    return
  }
  func.func @transform_0(%arg0: i32, %arg1: i32) -> (i32, i32) {
    %c1_i32 = arith.constant 1 : i32
    %0 = arith.muli %arg0, %c1_i32 : i32
    %1 = arith.addi %0, %arg1 : i32
    %c0_i32 = arith.constant 0 : i32
    %2 = arith.minsi %1, %c0_i32 : i32
    %c0_i32_0 = arith.constant 0 : i32
    %c0_i32_1 = arith.constant 0 : i32
    return %2, %c0_i32_0 : i32, i32
  }
  func.func @transform_1(%arg0: i32, %arg1: i32) -> (i32, i32) {
    %c1_i32 = arith.constant 1 : i32
    %0 = arith.muli %arg0, %c1_i32 : i32
    %1 = arith.addi %0, %arg1 : i32
    %c0_i32 = arith.constant 0 : i32
    %2 = arith.minsi %1, %c0_i32 : i32
    %c0_i32_0 = arith.constant 0 : i32
    %c0_i32_1 = arith.constant 0 : i32
    return %2, %c0_i32_0 : i32, i32
  }
  func.func @transform_2(%arg0: i32, %arg1: i32) -> (i32, i32, i32) {
    %c0_i32 = arith.constant 0 : i32
    %c0_i32_0 = arith.constant 0 : i32
    %c0_i32_1 = arith.constant 0 : i32
    return %arg0, %c0_i32, %c0_i32_0 : i32, i32, i32
  }
}

</mosaic_0001>

<llo_original>
// kernel: tpu_custom_call.1
$region0: #{tpu_custom_call.1}
  #allocation0 [shape = 'u32[]', space=smem, size = 0x4, offset = 0x4, fixed_abs, tag = 'smem constant byte address 0x4 - core index']
  #allocation1 [shape = 'u32[144,128]{1,0:T(1,128)}', space=vmem, size = 0x12000, scoped, tag = 'internal scratch']
  #allocation2 [shape = 'f32[8,128]{1,0:T(8,128)}', space=vmem, size = 0x1000, scoped, tag = 'scratch operand']
  %s0 = inlined_call_operand.hbm [shape: f32[16,128], index: 0, kind: input, shape index: {}]
  %s1 = inlined_call_operand.hbm [shape: f32[16,128], index: 1, kind: input, shape index: {}]
  %s2 = inlined_call_operand.hbm [shape: f32[1,1,1], index: 2, kind: output, shape index: {}]
  %s3 = sld [smem:[#allocation0]]
  $region34: #{tpu_custom_call.1} parent=0
    _
  %s5 = ssub.s32 1, %s3
  %s6 = scalar_select 0, %s5, %s3
  $region1: #{tpu_custom_call.1} parent=0
    #allocation3 [shape = 'u8[8192]{0}', space=vmem, size = 0x2000, scoped, tag = 'input window, operand 0, single buffered']
    #allocation4 [shape = 's32[1]{0}', space=sflag, size = 0x4, scoped, tag = 'scoped memory for tpu_custom_call.1']
    #allocation5 [shape = 's32[1]{0}', space=sflag, size = 0x4, scoped, tag = 'scoped memory for tpu_custom_call.1']
    #allocation6 [shape = 'u8[8192]{0}', space=vmem, size = 0x2000, scoped, tag = 'input window, operand 1, single buffered']
    #allocation7 [shape = 's32[1]{0}', space=sflag, size = 0x4, scoped, tag = 'scoped memory for tpu_custom_call.1']
    #allocation8 [shape = 'u8[512]{0}', space=vmem, size = 0x400, scoped, tag = 'output window, operand 0, single buffered']
    %7 = vsyncpa [#allocation4], 0
    %8 = vsyncpa [#allocation7], 0
    %9 = vsyncpa [#allocation5], 0
    // Predicated region
    $region2: #{tpu_custom_call.1} parent=1 // pred_check
      _
    $region3: #{tpu_custom_call.1} parent=1 // pred_check_branch
      %11 = sbr.rel (0) target = $region5
    $region4: #{tpu_custom_call.1} parent=1 // pred_region
      %s12 = sadd.s32 0, 0
      %p13 = scmp.lt.s32.totalorder %s12, 0
      %s14 = scalar_select %p13, %s12, 0
      %s15 = smul.u32 2, %s14
      %s17 = ssub.s32 256, 256
      %18 = vsyncadd [#allocation4], %s17
      %s19 = smul.addr %s15, 128
      %s20 = scalar_lea.hbm %s0, %s19
      %s21 = sshll.u32 [#allocation3], 4
      %s22 = int_to_ptr.vmem [resolvable:$true] %s21
      %27 = dma.hbm_to_vmem [thread:$0]  %s20, 256, %s22, [#allocation4], 128, 128, 8
    $region5: #{tpu_custom_call.1} parent=1 // pred_fallthru
      _
    // Predicated region
    $region6: #{tpu_custom_call.1} parent=1 // pred_check
      _
    $region7: #{tpu_custom_call.1} parent=1 // pred_check_branch
      %29 = sbr.rel (0) target = $region9
    $region8: #{tpu_custom_call.1} parent=1 // pred_region
      %s30 = sadd.s32 0, 0
      %p31 = scmp.lt.s32.totalorder %s30, 0
      %s32 = scalar_select %p31, %s30, 0
      %s33 = smul.u32 2, %s32
      %s35 = ssub.s32 256, 256
      %36 = vsyncadd [#allocation7], %s35
      %s37 = smul.addr %s33, 128
      %s38 = scalar_lea.hbm %s1, %s37
      %s39 = sshll.u32 [#allocation6], 4
      %s40 = int_to_ptr.vmem [resolvable:$true] %s39
      %45 = dma.hbm_to_vmem [thread:$0]  %s38, 256, %s40, [#allocation7], 128, 128, 8
    $region9: #{tpu_custom_call.1} parent=1 // pred_fallthru
      _
    // Predicated region
    $region10: #{tpu_custom_call.1} parent=1 // pred_check
      _
    $region11: #{tpu_custom_call.1} parent=1 // pred_check_branch
      %47 = sbr.rel (0) target = $region13
    $region12: #{tpu_custom_call.1} parent=1 // pred_region
      %48 = dma.done [#allocation4], 256
    $region13: #{tpu_custom_call.1} parent=1 // pred_fallthru
      _
    // Predicated region
    $region14: #{tpu_custom_call.1} parent=1 // pred_check
      _
    $region15: #{tpu_custom_call.1} parent=1 // pred_check_branch
      %50 = sbr.rel (0) target = $region17
    $region16: #{tpu_custom_call.1} parent=1 // pred_region
      %51 = dma.done [#allocation7], 256
    $region17: #{tpu_custom_call.1} parent=1 // pred_fallthru
      _
    %s52 = sadd.s32 0, 0
    %p53 = scmp.lt.s32.totalorder %s52, 0
    %s54 = scalar_select %p53, %s52, 0
    %s55 = smul.u32 2, %s54
    %s56 = sadd.s32 0, 0
    %p57 = scmp.lt.s32.totalorder %s56, 0
    %s58 = scalar_select %p57, %s56, 0
    %s59 = smul.u32 2, %s58
    %p60 = scmp.eq.s32.totalorder 0, 0
    // Predicated region
    $region18: #{tpu_custom_call.1} parent=1 // pred_check
      %p61 = pneg %p60
    $region19: #{tpu_custom_call.1} parent=1 // pred_check_branch
      %63 = sbr.rel (%p61) target = $region21
    $region20: #{tpu_custom_call.1} parent=1 // pred_region
      %64 = vst [vmem:[#allocation2] sm:$0xff] 0.0
    $region21: #{tpu_custom_call.1} parent=1 // pred_fallthru
      _
    %v65 = vld [vmem:[#allocation3] sm:$0xff]
    %v66 = vld [vmem:[#allocation3 + $0x8] sm:$0xff]
    %v67 = vld [vmem:[#allocation6] sm:$0xff]
    %v68 = vld [vmem:[#allocation6 + $0x8] sm:$0xff]
    %v69 = vsub.f32 %v65, %v67
    %v70 = vsub.f32 %v66, %v68
    %v71 = vmul.f32 %v69, %v69
    %v72 = vmul.f32 %v70, %v70
    %v73 = vadd.f32 %v71, 1e-12
    %v74 = vadd.f32 %v72, 1e-12
    %v75 = vrsqrt.pop %v73
    %v76 = vmul.f32 %v73, %v75
    %vm77 = vcmp.eq.f32.partialorder %v73, inf
    %v78 = vsel %vm77, %v73, %v76
    %vm79 = vcmp.eq.f32.partialorder %v73, 0.0
    %v80 = vand.u32 %v73, 2147483648
    %v81 = vsel %vm79, %v80, %v78
    %v82 = vrsqrt.pop %v74
    %v83 = vmul.f32 %v74, %v82
    %vm84 = vcmp.eq.f32.partialorder %v74, inf
    %v85 = vsel %vm84, %v74, %v83
    %vm86 = vcmp.eq.f32.partialorder %v74, 0.0
    %v87 = vand.u32 %v74, 2147483648
    %v88 = vsel %vm86, %v87, %v85
    %v89 = vld [vmem:[#allocation2] sm:$0xff]
    %v90 = vadd.f32 %v81, %v88
    %v91 = vadd.f32 %v89, %v90
    %92 = vst [vmem:[#allocation2] sm:$0xff] %v91
    // Predicated region
    $region22: #{tpu_custom_call.1} parent=1 // pred_check
      %p93 = pneg %p60
    $region23: #{tpu_custom_call.1} parent=1 // pred_check_branch
      %95 = sbr.rel (%p93) target = $region25
    $region24: #{tpu_custom_call.1} parent=1 // pred_region
      %v96 = vld [vmem:[#allocation2] sm:$0xff]
      %97 = vadd.xlane.f32.xlu0 %v96
      %v98 = vpop.xlane.xlu0 %97
      %v99 = vrot.slane %v98, 4
      %v100 = vadd.f32 %v98, %v99
      %v101 = vrot.slane %v100, 2
      %v102 = vadd.f32 %v100, %v101
      %v103 = vrot.slane %v102, 1
      %v104 = vadd.f32 %v102, %v103
      %s105 = vtos %v104
      %v106 = vstv %s105
      %vm107 = vcmask 0
      %108 = vst.msk [vmem:[#allocation8] sm:$0x1] %vm107, %v106
    $region25: #{tpu_custom_call.1} parent=1 // pred_fallthru
      _
    // Predicated region
    $region26: #{tpu_custom_call.1} parent=1 // pred_check
      _
    $region27: #{tpu_custom_call.1} parent=1 // pred_check_branch
      %110 = sbr.rel (0) target = $region29
    $region28: #{tpu_custom_call.1} parent=1 // pred_region
      %s112 = ssub.s32 16, 16
      %113 = vsyncadd [#allocation5], %s112
      %s115 = sshll.u32 [#allocation8], 4
      %s116 = int_to_ptr.vmem [resolvable:$true] %s115
      %118 = dma.vmem_to_hbm [thread:$0]  %s116, 16, %s2, [#allocation5]
    $region29: #{tpu_custom_call.1} parent=1 // pred_fallthru
      _
    // Predicated region
    $region30: #{tpu_custom_call.1} parent=1 // pred_check
      _
    $region31: #{tpu_custom_call.1} parent=1 // pred_check_branch
      %120 = sbr.rel (0) target = $region33
    $region32: #{tpu_custom_call.1} parent=1 // pred_region
      %121 = dma.done [#allocation5], 16
    $region33: #{tpu_custom_call.1} parent=1 // pred_fallthru
      _
    %122 = vsyncpa [#allocation4], 1
    %123 = vsyncpa [#allocation7], 1
    %124 = vsyncpa [#allocation5], 1

</llo_original>
